<compile_context>
chip_gen: v7x
topology: tpu7x:2x2x1
jax: 0.10.0
libtpu: 0.0.40
codegen_flags: <defaults>
</compile_context>

<pallas_src>
import functools

import jax
import jax.numpy as jnp
from jax import lax
from jax.experimental import pallas as pl
from jax.experimental.pallas import tpu as pltpu


def _round_up(x: int, m: int) -> int:
    return ((x + m - 1) // m) * m


def _cdiv(a: int, b: int) -> int:
    return (a + b - 1) // b


def _tagger_kernel_fused(x_ref, w_ref, b_ref, o_ref, *, precision):
    """Single-K-step kernel: fused matmul + bias + downcast, no accumulator passes."""
    o_ref[...] = (
        jnp.dot(x_ref[...], w_ref[...],
                preferred_element_type=jnp.float32, precision=precision)
        + b_ref[...]
    ).astype(o_ref.dtype)


def _tagger_kernel_ktiled(x_ref, w_ref, b_ref, o_ref, acc_ref, *, precision):
    """K-tiled fallback (very large input_dim): f32 VMEM accumulator over K axis."""
    kk = pl.program_id(1)

    @pl.when(kk == 0)
    def _():
        acc_ref[...] = jnp.zeros_like(acc_ref)

    acc_ref[...] += jnp.dot(x_ref[...], w_ref[...],
                            preferred_element_type=jnp.float32, precision=precision)

    @pl.when(kk == pl.num_programs(1) - 1)
    def _():
        o_ref[...] = (acc_ref[...] + b_ref[...]).astype(o_ref.dtype)


@functools.partial(jax.jit, static_argnames=("tm_max",))
def tagger_forward(x, w_t, b, *, tm_max: int = 1024):
    """x: (..., input_dim); w_t: (input_dim, tagset_size); b: (tagset_size,)."""
    *lead, k = x.shape
    tagset_size = w_t.shape[1]
    m = 1
    for d in lead:
        m *= d

    itemsize = jnp.dtype(x.dtype).itemsize
    # Explicit matmul precision: full f32 fidelity when inputs are f32 (matches
    # torch nn.Linear numerics); default single-pass MXU for bf16 inputs.
    precision = lax.Precision.HIGHEST if x.dtype == jnp.float32 else None

    n_pad = _round_up(tagset_size, 128)            # lane-dense output / MXU N

    # ---- M tile: as big as reasonable to amortize per-step overhead, but keep
    # at least 2 tiles so v7x's two TensorCores both get work on the parallel axis.
    if m <= 8:
        tm = m                                     # equals full dim -> allowed block
    else:
        tm = min(tm_max, _round_up(m, 8))
        if _cdiv(m, tm) < 2:
            tm = _round_up(_cdiv(m, 2), 8)

    # ---- K tiling decision: prefer a single K step (W panel VMEM-resident, no
    # accumulator, no W re-streaming).  Only tile K when the buffers cannot fit.
    VMEM_BUDGET = 48 << 20                         # headroom under v7x's 64 MiB VMEM

    def vmem_single(tm_):
        return (2 * tm_ * k * itemsize             # x tiles (double buffered)
                + 2 * k * n_pad * itemsize         # W panel
                + 2 * n_pad * itemsize             # bias
                + 2 * tm_ * n_pad * itemsize)      # out tiles

    w_panel_bytes = 2 * k * n_pad * itemsize
    k_tiled = w_panel_bytes > (VMEM_BUDGET // 2)
    if not k_tiled:
        while tm > 256 and vmem_single(tm) > VMEM_BUDGET:
            tm = _round_up(tm // 2, 8)
        k_tiled = vmem_single(tm) > VMEM_BUDGET

    x2d = x.reshape(m, k)

    if not k_tiled:
        # Pad only W / b along N (tiny, correctness-critical for lane-dense stores).
        w_p = w_t if n_pad == tagset_size else jnp.pad(
            w_t, ((0, 0), (0, n_pad - tagset_size)))
        b_p = jnp.pad(b, (0, n_pad - tagset_size)).reshape(1, n_pad)

        grid_m = _cdiv(m, tm)
        kernel = functools.partial(_tagger_kernel_fused, precision=precision)
        grid = (grid_m,)
        in_specs = [
            pl.BlockSpec((tm, k), lambda i: (i, 0)),       # x tile (ragged last block ok)
            pl.BlockSpec((k, n_pad), lambda i: (0, 0)),    # W panel, resident across i
            pl.BlockSpec((1, n_pad), lambda i: (0, 0)),    # bias (constant)
        ]
        out_specs = pl.BlockSpec((tm, n_pad), lambda i: (i, 0))
        scratch_shapes = []
        dims = ("parallel",)
        needed_vmem = vmem_single(tm)
        w_traffic = k * n_pad * itemsize                   # W read once total
    else:
        # Rare fallback: huge input_dim.  K padding must be zeros (padded K columns
        # contribute to every output row).
        tk = 2048
        tm = min(tm, 512)
        k_pad = _round_up(k, tk)
        x2d = x2d if k_pad == k else jnp.pad(x2d, ((0, 0), (0, k_pad - k)))
        w_p = jnp.pad(w_t, ((0, k_pad - k), (0, n_pad - tagset_size)))
        b_p = jnp.pad(b, (0, n_pad - tagset_size)).reshape(1, n_pad)

        grid_m = _cdiv(m, tm)
        kernel = functools.partial(_tagger_kernel_ktiled, precision=precision)
        grid = (grid_m, k_pad // tk)
        in_specs = [
            pl.BlockSpec((tm, tk), lambda i, kk: (i, kk)),
            pl.BlockSpec((tk, n_pad), lambda i, kk: (kk, 0)),  # W re-streamed per M tile
            pl.BlockSpec((1, n_pad), lambda i, kk: (0, 0)),
        ]
        out_specs = pl.BlockSpec((tm, n_pad), lambda i, kk: (i, 0))
        scratch_shapes = [pltpu.VMEM((tm, n_pad), jnp.float32)]
        dims = ("parallel", "arbitrary")
        needed_vmem = (2 * tm * tk * itemsize + 2 * tk * n_pad * itemsize
                       + 2 * n_pad * itemsize + 2 * tm * n_pad * itemsize
                       + tm * n_pad * 4)
        w_traffic = grid_m * k_pad * n_pad * itemsize      # W re-read per M tile

    vmem_limit = int(min(60 << 20, max(32 << 20, needed_vmem + (4 << 20))))

    cost = pl.CostEstimate(
        flops=2 * m * k * n_pad,
        transcendentals=0,
        bytes_accessed=int(itemsize * m * k + w_traffic
                           + itemsize * n_pad + itemsize * m * n_pad),
    )

    out = pl.pallas_call(
        kernel,
        out_shape=jax.ShapeDtypeStruct((m, n_pad), x.dtype),
        grid_spec=pltpu.PrefetchScalarGridSpec(
            num_scalar_prefetch=0,
            grid=grid,
            in_specs=in_specs,
            out_specs=out_specs,
            scratch_shapes=scratch_shapes,
        ),
        compiler_params=pltpu.CompilerParams(
            dimension_semantics=dims,
            vmem_limit_bytes=vmem_limit,
        ),
        cost_estimate=cost,
    )(x2d, w_p, b_p)

    # Strip the N padding and restore the leading dims.
    if n_pad != tagset_size:
        out = out[:, :tagset_size]
    return out.reshape(*lead, tagset_size)


if __name__ == "__main__":
    # Small shapes consistent with the module's forward: (batch, seq, input_dim).
    batch, seq, input_dim, tagset_size = 2, 8, 32, 16

    key = jax.random.PRNGKey(0)
    kx, kw, kb = jax.random.split(key, 3)

    x = jax.random.normal(kx, (batch, seq, input_dim), dtype=jnp.float32)

    # Deterministic nn.Linear-style init (uniform in +/- 1/sqrt(fan_in)).
    bound = 1.0 / (input_dim ** 0.5)
    # Torch stores W as (tagset_size, input_dim); kernel takes it pre-transposed.
    w = jax.random.uniform(kw, (tagset_size, input_dim), minval=-bound, maxval=bound,
                           dtype=jnp.float32)
    b = jax.random.uniform(kb, (tagset_size,), minval=-bound, maxval=bound,
                           dtype=jnp.float32)
    w_t = w.T  # (input_dim, tagset_size)

    y = tagger_forward(x, w_t, b)
    jax.block_until_ready(y)

    # Reference check against plain JAX (same math as torch nn.Linear, f32 precision).
    y_ref = jnp.dot(x, w.T, precision=jax.lax.Precision.HIGHEST) + b
    assert y.shape == (batch, seq, tagset_size)
    assert jnp.allclose(y, y_ref, atol=1e-5, rtol=1e-5)

    print("KERNEL_OK")
</pallas_src>

<mosaic_0001>
module attributes {stable_mosaic.version = 11 : i64} {
  func.func @_tagger_kernel_fused(%arg0: i32, %arg1: memref<8x32xf32, #tpu.memory_space<vmem>>, %arg2: memref<32x128xf32, #tpu.memory_space<vmem>>, %arg3: memref<1x128xf32, #tpu.memory_space<vmem>>, %arg4: memref<8x128xf32, #tpu.memory_space<vmem>>) attributes {dimension_semantics = [#tpu.dimension_semantics<parallel>], iteration_bounds = array<i64: 2>, scalar_prefetch = 0 : i64, scratch_operands = 0 : i64, tpu.core_type = #tpu.core_type<tc>, window_params = [{transform_indices = @transform_0, window_bounds = array<i64: 8, 32>}, {pipeline_mode = #tpu.pipeline_mode<synchronous>, transform_indices = @transform_1, window_bounds = array<i64: 32, 128>}, {pipeline_mode = #tpu.pipeline_mode<synchronous>, transform_indices = @transform_2, window_bounds = array<i64: 1, 128>}, {transform_indices = @transform_3, window_bounds = array<i64: 8, 128>}]} {
    %c0 = arith.constant 0 : index
    %c0_0 = arith.constant 0 : index
    %0 = vector.load %arg1[%c0, %c0_0] : memref<8x32xf32, #tpu.memory_space<vmem>>, vector<8x32xf32>
    %c0_1 = arith.constant 0 : index
    %c0_2 = arith.constant 0 : index
    %1 = vector.load %arg2[%c0_1, %c0_2] : memref<32x128xf32, #tpu.memory_space<vmem>>, vector<32x128xf32>
    %cst = arith.constant dense<0.000000e+00> : vector<8x128xf32>
    %2 = tpu.matmul %0, %1, %cst {dimension_numbers = #tpu.dot_dimension_numbers<[1], [0], [0], [1], [0, 0, 1, 1], [], []>, precision = #tpu.contract_precision<fp32>} : vector<8x32xf32>, vector<32x128xf32>, vector<8x128xf32> -> vector<8x128xf32>
    %c0_3 = arith.constant 0 : index
    %c0_4 = arith.constant 0 : index
    %3 = vector.load %arg3[%c0_3, %c0_4] : memref<1x128xf32, #tpu.memory_space<vmem>>, vector<1x128xf32>
    %4 = vector.broadcast %3 : vector<1x128xf32> to vector<8x128xf32>
    %5 = arith.addf %2, %4 : vector<8x128xf32>
    %c0_5 = arith.constant 0 : index
    %c0_6 = arith.constant 0 : index
    %6 = vector.load %arg4[%c0_5, %c0_6] : memref<8x128xf32, #tpu.memory_space<vmem>>, vector<8x128xf32>
    tpu.vector_store %arg4[%c0_5, %c0_6], %5 {strides = array<i32>} : memref<8x128xf32, #tpu.memory_space<vmem>>, vector<8x128xf32>,
    return
  }
  func.func @transform_0(%arg0: i32) -> (i32, i32) {
    %c0_i32 = arith.constant 0 : i32
    %c0_i32_0 = arith.constant 0 : i32
    return %arg0, %c0_i32 : i32, i32
  }
  func.func @transform_1(%arg0: i32) -> (i32, i32) {
    %c0_i32 = arith.constant 0 : i32
    %c0_i32_0 = arith.constant 0 : i32
    %c0_i32_1 = arith.constant 0 : i32
    return %c0_i32, %c0_i32_0 : i32, i32
  }
  func.func @transform_2(%arg0: i32) -> (i32, i32) {
    %c0_i32 = arith.constant 0 : i32
    %c0_i32_0 = arith.constant 0 : i32
    %c0_i32_1 = arith.constant 0 : i32
    return %c0_i32, %c0_i32_0 : i32, i32
  }
  func.func @transform_3(%arg0: i32) -> (i32, i32) {
    %c0_i32 = arith.constant 0 : i32
    %c0_i32_0 = arith.constant 0 : i32
    return %arg0, %c0_i32 : i32, i32
  }
}

</mosaic_0001>

<llo_original>
// kernel: tagger_forward.1
$region0: #{tagger_forward.1}
  #allocation0 [shape = 'u32[]', space=smem, size = 0x4, offset = 0x4, fixed_abs, tag = 'smem constant byte address 0x4 - core index']
  #allocation1 [shape = 'u32[144,128]{1,0:T(1,128)}', space=vmem, size = 0x12000, scoped, tag = 'internal scratch']
  %s0 = inlined_call_operand.vmem [shape: f32[16,32], index: 0, kind: input, shape index: {}]
  %s1 = inlined_call_operand.vmem [shape: f32[32,128], index: 1, kind: input, shape index: {}]
  %s2 = inlined_call_operand.vmem [shape: f32[1,128], index: 2, kind: input, shape index: {}]
  %s3 = inlined_call_operand.vmem [shape: f32[16,128], index: 3, kind: output, shape index: {}]
  %s4 = sld [smem:[#allocation0]]
  $region45: #{tagger_forward.1} parent=0
    _
  %s6 = ssub.s32 1, %s4
  %s7 = scalar_select 0, %s6, %s4
  loop: start=0, step=1, limit=4
  $region2: #{tagger_forward.1} parent=0 // loop_pre_header
    _
  $region3: #{tagger_forward.1} parent=0 // loop_header
    %s9 = sphi 0, %s13
    %p10 = scmp.ge.s32.totalorder %s9, 4
    %s19 = sphi 0, %s21
    %s22 = sphi 0, %s19
    %s23 = sphi 0, %s22
    %s39 = sphi 0, %s23
    %s43 = sphi 0, %s43
    %s45 = sphi 0, %s43
    %s46 = sphi 0, %s45
    %s60 = sphi 0, %s46
    %s64 = sphi 0, %s64
    %s66 = sphi 0, %s64
    %s67 = sphi 0, %s66
    %s81 = sphi 0, %s67
    %s87 = sphi 0, %s89
    %s90 = sphi 0, %s87
    %s91 = sphi 0, %s90
    %s107 = sphi 0, %s91
  $region4: #{tagger_forward.1} parent=0 // loop_header_branch
    %12 = sbr.rel (%p10) target = $region8
  $region5: #{tagger_forward.1} parent=0 // loop_body
    %s14 = ssub.s32 %s9, 1
    %s15 = ssub.s32 %s9, 2
    %s16 = sadd.s32 %s9, 1
    %s17 = ssub.s32 %s9, %s16
    %p18 = scmp.eq.s32.totalorder %s17, 0
    %s20 = sadd.s32 %s19, 1
    %s21 = scalar_select %p18, %s19, %s20
    %p24 = pneg %p18
    %p25 = scmp.eq.s32.totalorder %s9, 1
    %p26 = por %p24, %p25
    %p27 = scmp.ne.s32.totalorder %s19, %s22
    %p28 = scmp.eq.s32.totalorder %s9, 0
    %p29 = por %p27, %p28
    %p30 = scmp.ne.s32.totalorder %s19, %s22
    %p31 = scmp.eq.s32.totalorder %s14, 1
    %p32 = por %p30, %p31
    %p33 = scmp.ne.s32.totalorder %s22, %s23
    %p34 = scmp.eq.s32.totalorder %s14, 0
    %p35 = por %p33, %p34
    %p36 = scmp.ne.s32.totalorder %s22, %s23
    %p37 = scmp.eq.s32.totalorder %s15, 1
    %p38 = por %p36, %p37
    %p40 = scmp.ne.s32.totalorder %s23, %s39
    %p41 = scmp.eq.s32.totalorder %s15, 0
    %p42 = por %p40, %p41
    %s44 = sadd.s32 %s43, 1
    %p47 = scmp.eq.s32.totalorder %s9, 1
    %p48 = scmp.ne.s32.totalorder %s43, %s45
    %p49 = scmp.eq.s32.totalorder %s9, 0
    %p50 = por %p48, %p49
    %p51 = scmp.ne.s32.totalorder %s43, %s45
    %p52 = scmp.eq.s32.totalorder %s14, 1
    %p53 = por %p51, %p52
    %p54 = scmp.ne.s32.totalorder %s45, %s46
    %p55 = scmp.eq.s32.totalorder %s14, 0
    %p56 = por %p54, %p55
    %p57 = scmp.ne.s32.totalorder %s45, %s46
    %p58 = scmp.eq.s32.totalorder %s15, 1
    %p59 = por %p57, %p58
    %p61 = scmp.ne.s32.totalorder %s46, %s60
    %p62 = scmp.eq.s32.totalorder %s15, 0
    %p63 = por %p61, %p62
    %s65 = sadd.s32 %s64, 1
    %p68 = scmp.eq.s32.totalorder %s9, 1
    %p69 = scmp.ne.s32.totalorder %s64, %s66
    %p70 = scmp.eq.s32.totalorder %s9, 0
    %p71 = por %p69, %p70
    %p72 = scmp.ne.s32.totalorder %s64, %s66
    %p73 = scmp.eq.s32.totalorder %s14, 1
    %p74 = por %p72, %p73
    %p75 = scmp.ne.s32.totalorder %s66, %s67
    %p76 = scmp.eq.s32.totalorder %s14, 0
    %p77 = por %p75, %p76
    %p78 = scmp.ne.s32.totalorder %s66, %s67
    %p79 = scmp.eq.s32.totalorder %s15, 1
    %p80 = por %p78, %p79
    %p82 = scmp.ne.s32.totalorder %s67, %s81
    %p83 = scmp.eq.s32.totalorder %s15, 0
    %p84 = por %p82, %p83
    %s85 = ssub.s32 %s9, %s16
    %p86 = scmp.eq.s32.totalorder %s85, 0
    %s88 = sadd.s32 %s87, 1
    %s89 = scalar_select %p86, %s87, %s88
    %p92 = pneg %p86
    %p93 = scmp.eq.s32.totalorder %s9, 1
    %p94 = por %p92, %p93
    %p95 = scmp.ne.s32.totalorder %s87, %s90
    %p96 = scmp.eq.s32.totalorder %s9, 0
    %p97 = por %p95, %p96
    %p98 = scmp.ne.s32.totalorder %s87, %s90
    %p99 = scmp.eq.s32.totalorder %s14, 1
    %p100 = por %p98, %p99
    %p101 = scmp.ne.s32.totalorder %s90, %s91
    %p102 = scmp.eq.s32.totalorder %s14, 0
    %p103 = por %p101, %p102
    %p104 = scmp.ne.s32.totalorder %s90, %s91
    %p105 = scmp.eq.s32.totalorder %s15, 1
    %p106 = por %p104, %p105
    %p108 = scmp.ne.s32.totalorder %s91, %s107
    %p109 = scmp.eq.s32.totalorder %s15, 0
    %p110 = por %p108, %p109
    %p111 = scmp.le.s32.totalorder 1, %s9
    %p112 = scmp.lt.s32.totalorder %s9, 3
    %p113 = pnand %p111, %p112
    %p114 = pneg %p113
    // Predicated region
    $region9: #{tagger_forward.1} parent=5 // pred_check
      _
    $region10: #{tagger_forward.1} parent=5 // pred_check_branch
      %116 = sbr.rel (%p113) target = $region12
    $region11: #{tagger_forward.1} parent=5 // pred_region
      %s117 = ssub.s32 %s9, 1
      // Predicated region
      $region13: #{tagger_forward.1} parent=11 // pred_check
        %p118 = pneg %p56
      $region14: #{tagger_forward.1} parent=11 // pred_check_branch
        %120 = sbr.rel (%p118) target = $region16
      $region15: #{tagger_forward.1} parent=11 // pred_region
        _
      $region16: #{tagger_forward.1} parent=11 // pred_fallthru
        _
      // Predicated region
      $region17: #{tagger_forward.1} parent=11 // pred_check
        %p121 = pneg %p77
      $region18: #{tagger_forward.1} parent=11 // pred_check_branch
        %123 = sbr.rel (%p121) target = $region20
      $region19: #{tagger_forward.1} parent=11 // pred_region
        _
      $region20: #{tagger_forward.1} parent=11 // pred_fallthru
        _
    $region12: #{tagger_forward.1} parent=5 // pred_fallthru
      _
    %p124 = scmp.lt.s32.totalorder %s9, 2
    // Predicated region
    $region21: #{tagger_forward.1} parent=5 // pred_check
      %p125 = pneg %p124
    $region22: #{tagger_forward.1} parent=5 // pred_check_branch
      %127 = sbr.rel (%p125) target = $region24
    $region23: #{tagger_forward.1} parent=5 // pred_region
      // Predicated region
      $region25: #{tagger_forward.1} parent=23 // pred_check
        %p128 = pneg %p29
      $region26: #{tagger_forward.1} parent=23 // pred_check_branch
        %130 = sbr.rel (%p128) target = $region28
      $region27: #{tagger_forward.1} parent=23 // pred_region
        %p131 = scmp.lt.s32.totalorder %s9, 1
        %s132 = scalar_select %p131, %s9, 1
        %s133 = smul.addr %s132, 8
        %s134 = scalar_lea.vmem %s0, %s133
      $region28: #{tagger_forward.1} parent=23 // pred_fallthru
        _
    $region24: #{tagger_forward.1} parent=5 // pred_fallthru
      _
    %p135 = scmp.le.s32.totalorder 1, %s9
    %p136 = scmp.lt.s32.totalorder %s9, 3
    %p137 = pnand %p135, %p136
    %p138 = pneg %p137
    // Predicated region
    $region29: #{tagger_forward.1} parent=5 // pred_check
      _
    $region30: #{tagger_forward.1} parent=5 // pred_check_branch
      %140 = sbr.rel (%p137) target = $region32
    $region31: #{tagger_forward.1} parent=5 // pred_region
      %s141 = ssub.s32 %s9, 1
      %p142 = scmp.lt.s32.totalorder %s14, 1
      %s143 = scalar_select %p142, %s14, 1
      %s144 = smul.addr %s143, 8
      %s145 = scalar_lea.vmem %s0, %s144
      %p146 = pneg %p35
      %p147 = pneg %p32
      %p148 = pneg %p56
      %p149 = pneg %p53
      %p150 = pneg %p77
      %p151 = pneg %p74
      %p152 = pneg %p103
      %p153 = pneg %p100
      %p154 = scmp.lt.s32.totalorder %s14, 1
      %s155 = scalar_select %p154, %s14, 1
      %s156 = smul.addr %s155, 8
      %s157 = scalar_lea.vmem %s3, %s156
      %p158 = scmp.lt.s32.totalorder %s14, 1
      %s159 = scalar_select %p158, %s14, 1
      %s160 = smul.addr %s159, 8
      %s161 = scalar_lea.vmem %s0, %s160
      %p162 = scmp.lt.s32.totalorder %s14, 1
      %s163 = scalar_select %p162, %s14, 1
      %s164 = smul.addr %s163, 8
      %s165 = scalar_lea.vmem %s3, %s164
      %v166 = vld [vmem:[%s161] sm:$0xff]
      %v167 = vld [vmem:[%s1] sm:$0xff]
      %v168 = vld [vmem:[%s1 + $0x8] sm:$0xff]
      %v169 = vld [vmem:[%s1 + $0x10] sm:$0xff]
      %v170 = vld [vmem:[%s1 + $0x18] sm:$0xff]
      %v171 = vld [vmem:[%s2] sm:$0x1]
      %v173 = vlaneseq
      %v174 = vshrl.u32 %v173, 7
      %v175 = vsub.s32 0, %v174
      %v176 = vrot.slane %v171, %v175
      %vm178 = vcmask 261120
      %v180 = vsel %vm178, %v166, 0
      %182 = vmatprep.subr.mxu0 0.0
      %v183 = vand.u32 %v167, 4294901760
      %184 = vmatpush1.msra.mxu0 %v183
      %185 = vmatprep.subr.mxu0 0.0
      %v186 = vand.u32 %v168, 4294901760
      %187 = vmatpush1.msra.mxu0 %v186
      %188 = vmatprep.subr.mxu0 0.0
      %v189 = vand.u32 %v169, 4294901760
      %190 = vmatpush1.msra.mxu0 %v189
      %191 = vmatprep.subr.mxu0 0.0
      %v192 = vand.u32 %v170, 4294901760
      %193 = vmatpush1.msra.mxu0 %v192
      %194 = vmatprep.subr.mxu0 0.0
      %195 = vmatpush1.msra.mxu0 0.0
      %196 = vmatprep.subr.mxu0 0.0
      %197 = vmatpush1.msra.mxu0 0.0
      %198 = vmatprep.subr.mxu0 0.0
      %199 = vmatpush1.msra.mxu0 0.0
      %200 = vmatprep.subr.mxu0 0.0
      %201 = vmatpush1.msra.mxu0 0.0
      %202 = vmatprep.subr.mxu0 0.0
      %203 = vmatpush1.msra.mxu0 0.0
      %204 = vmatprep.subr.mxu0 0.0
      %205 = vmatpush1.msra.mxu0 0.0
      %206 = vmatprep.subr.mxu0 0.0
      %207 = vmatpush1.msra.mxu0 0.0
      %208 = vmatprep.subr.mxu0 0.0
      %209 = vmatpush1.msra.mxu0 0.0
      %210 = vmatprep.subr.mxu0 0.0
      %211 = vmatpush1.msra.mxu0 0.0
      %212 = vmatprep.subr.mxu0 0.0
      %213 = vmatpush1.msra.mxu0 0.0
      %214 = vmatprep.subr.mxu0 0.0
      %215 = vmatpush1.msra.mxu0 0.0
      %216 = vmatprep.subr.mxu0 0.0
      %217 = vmatpush1.msra.mxu0 0.0
      %218 = vmatprep.subr.mxu0 0.0
      %219 = vmatpush1.msra.mxu0 0.0
      %220 = vmatprep.subr.mxu0 0.0
      %221 = vmatpush1.msra.mxu0 0.0
      %222 = vmatprep.subr.mxu0 0.0
      %223 = vmatpush1.msra.mxu0 0.0
      %224 = vmatprep.subr.mxu0 0.0
      %225 = vmatpush1.msra.mxu0 0.0
      %226 = vmatprep.subr.mxu0 0.0
      %227 = vmatpush1.msra.mxu0 0.0
      %228 = vmatprep.subr.mxu0 0.0
      %229 = vmatpush1.msra.mxu0 0.0
      %230 = vmatprep.subr.mxu0 0.0
      %231 = vmatpush1.msra.mxu0 0.0
      %232 = vmatprep.subr.mxu0 0.0
      %233 = vmatpush1.msra.mxu0 0.0
      %234 = vmatprep.subr.mxu0 0.0
      %235 = vmatpush1.msra.mxu0 0.0
      %236 = vmatprep.subr.mxu0 0.0
      %237 = vmatpush1.msra.mxu0 0.0
      %238 = vmatprep.subr.mxu0 0.0
      %239 = vmatpush1.msra.mxu0 0.0
      %240 = vmatprep.subr.mxu0 0.0
      %241 = vmatpush1.msra.mxu0 0.0
      %242 = vmatprep.subr.mxu0 0.0
      %243 = vmatpush1.msra.mxu0 0.0
      %244 = vmatprep.subr.mxu0 0.0
      %245 = vmatpush1.msra.mxu0 0.0
      %246 = vmatprep.subr.mxu0 0.0
      %247 = vmatpush1.msra.mxu0 0.0
      %248 = vmatprep.subr.mxu0 0.0
      %249 = vmatpush1.msra.mxu0 0.0
      %250 = vmatprep.mubr.f32.mxu0 0.0
      %v251 = vand.u32 %v180, 4294901760
      %v252 = vsub.f32 %v180, %v251
      %v253 = vand.u32 %v252, 4294901760
      %v254 = vsub.f32 %v252, %v253
      %v255 = vand.u32 %v254, 4294901760
      %256 = vmatmul.mubr.f32.gmra.mrb[0].mxu0 %v255
      %v257 = vpop.f32.mrb[0].mxu0
      %v258 = vadd.f32 %v176, %v257
      %v259 = vpop.f32.mrb[0].mxu0
      %260 = vdwg.mxu0
      %261 = vmatprep.subr.mxu0 0.0
      %v262 = vand.u32 %v167, 4294901760
      %v263 = vsub.f32 %v167, %v262
      %v264 = vand.u32 %v263, 4294901760
      %v265 = vsub.f32 %v263, %v264
      %v266 = vand.u32 %v265, 4294901760
      %267 = vmatpush1.msra.mxu0 %v266
      %268 = vmatprep.subr.mxu0 0.0
      %v269 = vand.u32 %v168, 4294901760
      %v270 = vsub.f32 %v168, %v269
      %v271 = vand.u32 %v270, 4294901760
      %v272 = vsub.f32 %v270, %v271
      %v273 = vand.u32 %v272, 4294901760
      %274 = vmatpush1.msra.mxu0 %v273
      %275 = vmatprep.subr.mxu0 0.0
      %v276 = vand.u32 %v169, 4294901760
      %v277 = vsub.f32 %v169, %v276
      %v278 = vand.u32 %v277, 4294901760
      %v279 = vsub.f32 %v277, %v278
      %v280 = vand.u32 %v279, 4294901760
      %281 = vmatpush1.msra.mxu0 %v280
      %282 = vmatprep.subr.mxu0 0.0
      %v283 = vand.u32 %v170, 4294901760
      %v284 = vsub.f32 %v170, %v283
      %v285 = vand.u32 %v284, 4294901760
      %v286 = vsub.f32 %v284, %v285
      %v287 = vand.u32 %v286, 4294901760
      %288 = vmatpush1.msra.mxu0 %v287
      %289 = vmatprep.subr.mxu0 0.0
      %290 = vmatpush1.msra.mxu0 0.0
      %291 = vmatprep.subr.mxu0 0.0
      %292 = vmatpush1.msra.mxu0 0.0
      %293 = vmatprep.subr.mxu0 0.0
      %294 = vmatpush1.msra.mxu0 0.0
      %295 = vmatprep.subr.mxu0 0.0
      %296 = vmatpush1.msra.mxu0 0.0
      %297 = vmatprep.subr.mxu0 0.0
      %298 = vmatpush1.msra.mxu0 0.0
      %299 = vmatprep.subr.mxu0 0.0
      %300 = vmatpush1.msra.mxu0 0.0
      %301 = vmatprep.subr.mxu0 0.0
      %302 = vmatpush1.msra.mxu0 0.0
      %303 = vmatprep.subr.mxu0 0.0
      %304 = vmatpush1.msra.mxu0 0.0
      %305 = vmatprep.subr.mxu0 0.0
      %306 = vmatpush1.msra.mxu0 0.0
      %307 = vmatprep.subr.mxu0 0.0
      %308 = vmatpush1.msra.mxu0 0.0
      %309 = vmatprep.subr.mxu0 0.0
      %310 = vmatpush1.msra.mxu0 0.0
      %311 = vmatprep.subr.mxu0 0.0
      %312 = vmatpush1.msra.mxu0 0.0
      %313 = vmatprep.subr.mxu0 0.0
      %314 = vmatpush1.msra.mxu0 0.0
      %315 = vmatprep.subr.mxu0 0.0
      %316 = vmatpush1.msra.mxu0 0.0
      %317 = vmatprep.subr.mxu0 0.0
      %318 = vmatpush1.msra.mxu0 0.0
      %319 = vmatprep.subr.mxu0 0.0
      %320 = vmatpush1.msra.mxu0 0.0
      %321 = vmatprep.subr.mxu0 0.0
      %322 = vmatpush1.msra.mxu0 0.0
      %323 = vmatprep.subr.mxu0 0.0
      %324 = vmatpush1.msra.mxu0 0.0
      %325 = vmatprep.subr.mxu0 0.0
      %326 = vmatpush1.msra.mxu0 0.0
      %327 = vmatprep.subr.mxu0 0.0
      %328 = vmatpush1.msra.mxu0 0.0
      %329 = vmatprep.subr.mxu0 0.0
      %330 = vmatpush1.msra.mxu0 0.0
      %331 = vmatprep.subr.mxu0 0.0
      %332 = vmatpush1.msra.mxu0 0.0
      %333 = vmatprep.subr.mxu0 0.0
      %334 = vmatpush1.msra.mxu0 0.0
      %335 = vmatprep.subr.mxu0 0.0
      %336 = vmatpush1.msra.mxu0 0.0
      %337 = vmatprep.subr.mxu0 0.0
      %338 = vmatpush1.msra.mxu0 0.0
      %339 = vmatprep.subr.mxu0 0.0
      %340 = vmatpush1.msra.mxu0 0.0
      %341 = vmatprep.subr.mxu0 0.0
      %342 = vmatpush1.msra.mxu0 0.0
      %343 = vmatprep.subr.mxu0 0.0
      %344 = vmatpush1.msra.mxu0 0.0
      %345 = vmatprep.mubr.f32.mxu0 0.0
      %v346 = vand.u32 %v180, 4294901760
      %347 = vmatmul.mubr.f32.gmra.mrb[0].mxu0 %v346
      %v348 = vpop.f32.mrb[0].mxu0
      %v349 = vadd.f32 %v258, %v348
      %v350 = vpop.f32.mrb[0].mxu0
      %351 = vdwg.mxu0
      %352 = vmatprep.subr.mxu0 0.0
      %v353 = vand.u32 %v167, 4294901760
      %v354 = vsub.f32 %v167, %v353
      %355 = vmatpush1.msra.mxu0 %v354
      %356 = vmatprep.subr.mxu0 0.0
      %v357 = vand.u32 %v168, 4294901760
      %v358 = vsub.f32 %v168, %v357
      %359 = vmatpush1.msra.mxu0 %v358
      %360 = vmatprep.subr.mxu0 0.0
      %v361 = vand.u32 %v169, 4294901760
      %v362 = vsub.f32 %v169, %v361
      %363 = vmatpush1.msra.mxu0 %v362
      %364 = vmatprep.subr.mxu0 0.0
      %v365 = vand.u32 %v170, 4294901760
      %v366 = vsub.f32 %v170, %v365
      %367 = vmatpush1.msra.mxu0 %v366
      %368 = vmatprep.subr.mxu0 0.0
      %369 = vmatpush1.msra.mxu0 0.0
      %370 = vmatprep.subr.mxu0 0.0
      %371 = vmatpush1.msra.mxu0 0.0
      %372 = vmatprep.subr.mxu0 0.0
      %373 = vmatpush1.msra.mxu0 0.0
      %374 = vmatprep.subr.mxu0 0.0
      %375 = vmatpush1.msra.mxu0 0.0
      %376 = vmatprep.subr.mxu0 0.0
      %377 = vmatpush1.msra.mxu0 0.0
      %378 = vmatprep.subr.mxu0 0.0
      %379 = vmatpush1.msra.mxu0 0.0
      %380 = vmatprep.subr.mxu0 0.0
      %381 = vmatpush1.msra.mxu0 0.0
      %382 = vmatprep.subr.mxu0 0.0
      %383 = vmatpush1.msra.mxu0 0.0
      %384 = vmatprep.subr.mxu0 0.0
      %385 = vmatpush1.msra.mxu0 0.0
      %386 = vmatprep.subr.mxu0 0.0
      %387 = vmatpush1.msra.mxu0 0.0
      %388 = vmatprep.subr.mxu0 0.0
      %389 = vmatpush1.msra.mxu0 0.0
      %390 = vmatprep.subr.mxu0 0.0
      %391 = vmatpush1.msra.mxu0 0.0
      %392 = vmatprep.subr.mxu0 0.0
      %393 = vmatpush1.msra.mxu0 0.0
      %394 = vmatprep.subr.mxu0 0.0
      %395 = vmatpush1.msra.mxu0 0.0
      %396 = vmatprep.subr.mxu0 0.0
      %397 = vmatpush1.msra.mxu0 0.0
      %398 = vmatprep.subr.mxu0 0.0
      %399 = vmatpush1.msra.mxu0 0.0
      %400 = vmatprep.subr.mxu0 0.0
      %401 = vmatpush1.msra.mxu0 0.0
      %402 = vmatprep.subr.mxu0 0.0
      %403 = vmatpush1.msra.mxu0 0.0
      %404 = vmatprep.subr.mxu0 0.0
      %405 = vmatpush1.msra.mxu0 0.0
      %406 = vmatprep.subr.mxu0 0.0
      %407 = vmatpush1.msra.mxu0 0.0
      %408 = vmatprep.subr.mxu0 0.0
      %409 = vmatpush1.msra.mxu0 0.0
      %410 = vmatprep.subr.mxu0 0.0
      %411 = vmatpush1.msra.mxu0 0.0
      %412 = vmatprep.subr.mxu0 0.0
      %413 = vmatpush1.msra.mxu0 0.0
      %414 = vmatprep.subr.mxu0 0.0
      %415 = vmatpush1.msra.mxu0 0.0
      %416 = vmatprep.subr.mxu0 0.0
      %417 = vmatpush1.msra.mxu0 0.0
      %418 = vmatprep.subr.mxu0 0.0
      %419 = vmatpush1.msra.mxu0 0.0
      %420 = vmatprep.subr.mxu0 0.0
      %421 = vmatpush1.msra.mxu0 0.0
      %422 = vmatprep.subr.mxu0 0.0
      %423 = vmatpush1.msra.mxu0 0.0
      %424 = vmatprep.mubr.f32.mxu0 0.0
      %v425 = vand.u32 %v180, 4294901760
      %v426 = vsub.f32 %v180, %v425
      %427 = vmatmul.mubr.f32.gmra.mrb[0].mxu0 %v426
      %v428 = vpop.f32.mrb[0].mxu0
      %v429 = vadd.f32 %v349, %v428
      %v430 = vpop.f32.mrb[0].mxu0
      %431 = vdwg.mxu0
      %432 = vmatprep.subr.mxu0 0.0
      %v433 = vand.u32 %v167, 4294901760
      %434 = vmatpush1.msra.mxu0 %v433
      %435 = vmatprep.subr.mxu0 0.0
      %v436 = vand.u32 %v168, 4294901760
      %437 = vmatpush1.msra.mxu0 %v436
      %438 = vmatprep.subr.mxu0 0.0
      %v439 = vand.u32 %v169, 4294901760
      %440 = vmatpush1.msra.mxu0 %v439
      %441 = vmatprep.subr.mxu0 0.0
      %v442 = vand.u32 %v170, 4294901760
      %443 = vmatpush1.msra.mxu0 %v442
      %444 = vmatprep.subr.mxu0 0.0
      %445 = vmatpush1.msra.mxu0 0.0
      %446 = vmatprep.subr.mxu0 0.0
      %447 = vmatpush1.msra.mxu0 0.0
      %448 = vmatprep.subr.mxu0 0.0
      %449 = vmatpush1.msra.mxu0 0.0
      %450 = vmatprep.subr.mxu0 0.0
      %451 = vmatpush1.msra.mxu0 0.0
      %452 = vmatprep.subr.mxu0 0.0
      %453 = vmatpush1.msra.mxu0 0.0
      %454 = vmatprep.subr.mxu0 0.0
      %455 = vmatpush1.msra.mxu0 0.0
      %456 = vmatprep.subr.mxu0 0.0
      %457 = vmatpush1.msra.mxu0 0.0
      %458 = vmatprep.subr.mxu0 0.0
      %459 = vmatpush1.msra.mxu0 0.0
      %460 = vmatprep.subr.mxu0 0.0
      %461 = vmatpush1.msra.mxu0 0.0
      %462 = vmatprep.subr.mxu0 0.0
      %463 = vmatpush1.msra.mxu0 0.0
      %464 = vmatprep.subr.mxu0 0.0
      %465 = vmatpush1.msra.mxu0 0.0
      %466 = vmatprep.subr.mxu0 0.0
      %467 = vmatpush1.msra.mxu0 0.0
      %468 = vmatprep.subr.mxu0 0.0
      %469 = vmatpush1.msra.mxu0 0.0
      %470 = vmatprep.subr.mxu0 0.0
      %471 = vmatpush1.msra.mxu0 0.0
      %472 = vmatprep.subr.mxu0 0.0
      %473 = vmatpush1.msra.mxu0 0.0
      %474 = vmatprep.subr.mxu0 0.0
      %475 = vmatpush1.msra.mxu0 0.0
      %476 = vmatprep.subr.mxu0 0.0
      %477 = vmatpush1.msra.mxu0 0.0
      %478 = vmatprep.subr.mxu0 0.0
      %479 = vmatpush1.msra.mxu0 0.0
      %480 = vmatprep.subr.mxu0 0.0
      %481 = vmatpush1.msra.mxu0 0.0
      %482 = vmatprep.subr.mxu0 0.0
      %483 = vmatpush1.msra.mxu0 0.0
      %484 = vmatprep.subr.mxu0 0.0
      %485 = vmatpush1.msra.mxu0 0.0
      %486 = vmatprep.subr.mxu0 0.0
      %487 = vmatpush1.msra.mxu0 0.0
      %488 = vmatprep.subr.mxu0 0.0
      %489 = vmatpush1.msra.mxu0 0.0
      %490 = vmatprep.subr.mxu0 0.0
      %491 = vmatpush1.msra.mxu0 0.0
      %492 = vmatprep.subr.mxu0 0.0
      %493 = vmatpush1.msra.mxu0 0.0
      %494 = vmatprep.subr.mxu0 0.0
      %495 = vmatpush1.msra.mxu0 0.0
      %496 = vmatprep.subr.mxu0 0.0
      %497 = vmatpush1.msra.mxu0 0.0
      %498 = vmatprep.subr.mxu0 0.0
      %499 = vmatpush1.msra.mxu0 0.0
      %500 = vmatprep.mubr.f32.mxu0 0.0
      %v501 = vand.u32 %v180, 4294901760
      %v502 = vsub.f32 %v180, %v501
      %v503 = vand.u32 %v502, 4294901760
      %504 = vmatmul.mubr.f32.gmra.mrb[0].mxu0 %v503
      %v505 = vpop.f32.mrb[0].mxu0
      %v506 = vadd.f32 %v429, %v505
      %v507 = vpop.f32.mrb[0].mxu0
      %508 = vdwg.mxu0
      %509 = vmatprep.subr.mxu0 0.0
      %v510 = vand.u32 %v167, 4294901760
      %v511 = vsub.f32 %v167, %v510
      %v512 = vand.u32 %v511, 4294901760
      %513 = vmatpush1.msra.mxu0 %v512
      %514 = vmatprep.subr.mxu0 0.0
      %v515 = vand.u32 %v168, 4294901760
      %v516 = vsub.f32 %v168, %v515
      %v517 = vand.u32 %v516, 4294901760
      %518 = vmatpush1.msra.mxu0 %v517
      %519 = vmatprep.subr.mxu0 0.0
      %v520 = vand.u32 %v169, 4294901760
      %v521 = vsub.f32 %v169, %v520
      %v522 = vand.u32 %v521, 4294901760
      %523 = vmatpush1.msra.mxu0 %v522
      %524 = vmatprep.subr.mxu0 0.0
      %v525 = vand.u32 %v170, 4294901760
      %v526 = vsub.f32 %v170, %v525
      %v527 = vand.u32 %v526, 4294901760
      %528 = vmatpush1.msra.mxu0 %v527
      %529 = vmatprep.subr.mxu0 0.0
      %530 = vmatpush1.msra.mxu0 0.0
      %531 = vmatprep.subr.mxu0 0.0
      %532 = vmatpush1.msra.mxu0 0.0
      %533 = vmatprep.subr.mxu0 0.0
      %534 = vmatpush1.msra.mxu0 0.0
      %535 = vmatprep.subr.mxu0 0.0
      %536 = vmatpush1.msra.mxu0 0.0
      %537 = vmatprep.subr.mxu0 0.0
      %538 = vmatpush1.msra.mxu0 0.0
      %539 = vmatprep.subr.mxu0 0.0
      %540 = vmatpush1.msra.mxu0 0.0
      %541 = vmatprep.subr.mxu0 0.0
      %542 = vmatpush1.msra.mxu0 0.0
      %543 = vmatprep.subr.mxu0 0.0
      %544 = vmatpush1.msra.mxu0 0.0
      %545 = vmatprep.subr.mxu0 0.0
      %546 = vmatpush1.msra.mxu0 0.0
      %547 = vmatprep.subr.mxu0 0.0
      %548 = vmatpush1.msra.mxu0 0.0
      %549 = vmatprep.subr.mxu0 0.0
      %550 = vmatpush1.msra.mxu0 0.0
      %551 = vmatprep.subr.mxu0 0.0
      %552 = vmatpush1.msra.mxu0 0.0
      %553 = vmatprep.subr.mxu0 0.0
      %554 = vmatpush1.msra.mxu0 0.0
      %555 = vmatprep.subr.mxu0 0.0
      %556 = vmatpush1.msra.mxu0 0.0
      %557 = vmatprep.subr.mxu0 0.0
      %558 = vmatpush1.msra.mxu0 0.0
      %559 = vmatprep.subr.mxu0 0.0
      %560 = vmatpush1.msra.mxu0 0.0
      %561 = vmatprep.subr.mxu0 0.0
      %562 = vmatpush1.msra.mxu0 0.0
      %563 = vmatprep.subr.mxu0 0.0
      %564 = vmatpush1.msra.mxu0 0.0
      %565 = vmatprep.subr.mxu0 0.0
      %566 = vmatpush1.msra.mxu0 0.0
      %567 = vmatprep.subr.mxu0 0.0
      %568 = vmatpush1.msra.mxu0 0.0
      %569 = vmatprep.subr.mxu0 0.0
      %570 = vmatpush1.msra.mxu0 0.0
      %571 = vmatprep.subr.mxu0 0.0
      %572 = vmatpush1.msra.mxu0 0.0
      %573 = vmatprep.subr.mxu0 0.0
      %574 = vmatpush1.msra.mxu0 0.0
      %575 = vmatprep.subr.mxu0 0.0
      %576 = vmatpush1.msra.mxu0 0.0
      %577 = vmatprep.subr.mxu0 0.0
      %578 = vmatpush1.msra.mxu0 0.0
      %579 = vmatprep.subr.mxu0 0.0
      %580 = vmatpush1.msra.mxu0 0.0
      %581 = vmatprep.subr.mxu0 0.0
      %582 = vmatpush1.msra.mxu0 0.0
      %583 = vmatprep.subr.mxu0 0.0
      %584 = vmatpush1.msra.mxu0 0.0
      %585 = vmatprep.mubr.f32.mxu0 0.0
      %v586 = vand.u32 %v180, 4294901760
      %587 = vmatmul.mubr.f32.gmra.mrb[0].mxu0 %v586
      %v588 = vpop.f32.mrb[0].mxu0
      %v589 = vadd.f32 %v506, %v588
      %v590 = vpop.f32.mrb[0].mxu0
      %591 = vdwg.mxu0
      %592 = vmatprep.subr.mxu0 0.0
      %v593 = vand.u32 %v167, 4294901760
      %594 = vmatpush1.msra.mxu0 %v593
      %595 = vmatprep.subr.mxu0 0.0
      %v596 = vand.u32 %v168, 4294901760
      %597 = vmatpush1.msra.mxu0 %v596
      %598 = vmatprep.subr.mxu0 0.0
      %v599 = vand.u32 %v169, 4294901760
      %600 = vmatpush1.msra.mxu0 %v599
      %601 = vmatprep.subr.mxu0 0.0
      %v602 = vand.u32 %v170, 4294901760
      %603 = vmatpush1.msra.mxu0 %v602
      %604 = vmatprep.subr.mxu0 0.0
      %605 = vmatpush1.msra.mxu0 0.0
      %606 = vmatprep.subr.mxu0 0.0
      %607 = vmatpush1.msra.mxu0 0.0
      %608 = vmatprep.subr.mxu0 0.0
      %609 = vmatpush1.msra.mxu0 0.0
      %610 = vmatprep.subr.mxu0 0.0
      %611 = vmatpush1.msra.mxu0 0.0
      %612 = vmatprep.subr.mxu0 0.0
      %613 = vmatpush1.msra.mxu0 0.0
      %614 = vmatprep.subr.mxu0 0.0
      %615 = vmatpush1.msra.mxu0 0.0
      %616 = vmatprep.subr.mxu0 0.0
      %617 = vmatpush1.msra.mxu0 0.0
      %618 = vmatprep.subr.mxu0 0.0
      %619 = vmatpush1.msra.mxu0 0.0
      %620 = vmatprep.subr.mxu0 0.0
      %621 = vmatpush1.msra.mxu0 0.0
      %622 = vmatprep.subr.mxu0 0.0
      %623 = vmatpush1.msra.mxu0 0.0
      %624 = vmatprep.subr.mxu0 0.0
      %625 = vmatpush1.msra.mxu0 0.0
      %626 = vmatprep.subr.mxu0 0.0
      %627 = vmatpush1.msra.mxu0 0.0
      %628 = vmatprep.subr.mxu0 0.0
      %629 = vmatpush1.msra.mxu0 0.0
      %630 = vmatprep.subr.mxu0 0.0
      %631 = vmatpush1.msra.mxu0 0.0
      %632 = vmatprep.subr.mxu0 0.0
      %633 = vmatpush1.msra.mxu0 0.0
      %634 = vmatprep.subr.mxu0 0.0
      %635 = vmatpush1.msra.mxu0 0.0
      %636 = vmatprep.subr.mxu0 0.0
      %637 = vmatpush1.msra.mxu0 0.0
      %638 = vmatprep.subr.mxu0 0.0
      %639 = vmatpush1.msra.mxu0 0.0
      %640 = vmatprep.subr.mxu0 0.0
      %641 = vmatpush1.msra.mxu0 0.0
      %642 = vmatprep.subr.mxu0 0.0
      %643 = vmatpush1.msra.mxu0 0.0
      %644 = vmatprep.subr.mxu0 0.0
      %645 = vmatpush1.msra.mxu0 0.0
      %646 = vmatprep.subr.mxu0 0.0
      %647 = vmatpush1.msra.mxu0 0.0
      %648 = vmatprep.subr.mxu0 0.0
      %649 = vmatpush1.msra.mxu0 0.0
      %650 = vmatprep.subr.mxu0 0.0
      %651 = vmatpush1.msra.mxu0 0.0
      %652 = vmatprep.subr.mxu0 0.0
      %653 = vmatpush1.msra.mxu0 0.0
      %654 = vmatprep.subr.mxu0 0.0
      %655 = vmatpush1.msra.mxu0 0.0
      %656 = vmatprep.subr.mxu0 0.0
      %657 = vmatpush1.msra.mxu0 0.0
      %658 = vmatprep.subr.mxu0 0.0
      %659 = vmatpush1.msra.mxu0 0.0
      %660 = vmatprep.mubr.f32.mxu0 0.0
      %v661 = vand.u32 %v180, 4294901760
      %662 = vmatmul.mubr.f32.gmra.mrb[0].mxu0 %v661
      %v663 = vpop.f32.mrb[0].mxu0
      %v664 = vadd.f32 %v589, %v663
      %v665 = vpop.f32.mrb[0].mxu0
      %666 = vdwg.mxu0
      %667 = vst [vmem:[%s165] sm:$0xff] %v664
      %p668 = scmp.lt.s32.totalorder %s14, 1
      %s669 = scalar_select %p668, %s14, 1
      %s670 = smul.addr %s669, 8
      %s671 = scalar_lea.vmem %s3, %s670
      // Predicated region
      $region33: #{tagger_forward.1} parent=31 // pred_check
        %p672 = pneg %p100
      $region34: #{tagger_forward.1} parent=31 // pred_check_branch
        %674 = sbr.rel (%p672) target = $region36
      $region35: #{tagger_forward.1} parent=31 // pred_region
        _
      $region36: #{tagger_forward.1} parent=31 // pred_fallthru
        _
    $region32: #{tagger_forward.1} parent=5 // pred_fallthru
      _
    %p675 = scmp.le.s32.totalorder 2, %s9
    // Predicated region
    $region37: #{tagger_forward.1} parent=5 // pred_check
      %p676 = pneg %p675
    $region38: #{tagger_forward.1} parent=5 // pred_check_branch
      %678 = sbr.rel (%p676) target = $region40
    $region39: #{tagger_forward.1} parent=5 // pred_region
      %s679 = ssub.s32 %s9, 2
      // Predicated region
      $region41: #{tagger_forward.1} parent=39 // pred_check
        %p680 = pneg %p106
      $region42: #{tagger_forward.1} parent=39 // pred_check_branch
        %682 = sbr.rel (%p680) target = $region44
      $region43: #{tagger_forward.1} parent=39 // pred_region
        %p683 = scmp.lt.s32.totalorder %s15, 1
        %s684 = scalar_select %p683, %s15, 1
        %s685 = smul.addr %s684, 8
        %s686 = scalar_lea.vmem %s3, %s685
      $region44: #{tagger_forward.1} parent=39 // pred_fallthru
        _
    $region40: #{tagger_forward.1} parent=5 // pred_fallthru
      _
  $region6: #{tagger_forward.1} parent=0 // loop_footer
    %s13 = sadd.s32 1, %s9
  $region7: #{tagger_forward.1} parent=0 // loop_footer_branch
    %8 = sbr.rel target = $region3
  $region8: #{tagger_forward.1} parent=0 // loop_exit
    _

</llo_original>
